<compile_context>
chip_gen: v6e
topology: v6e:2x2x1
jax: 0.10.0
libtpu: 0.0.40
codegen_flags: <defaults>
</compile_context>

<pallas_src>
import math

import jax
import jax.numpy as jnp
from jax.experimental import pallas as pl
from jax.experimental.pallas import tpu as pltpu


def gcn_kernel(x_ref, adj_ref, w_ref, b_ref, o_ref):
    adj = adj_ref[...]                                        # (N, N)   f32
    x = x_ref[...]                                            # (N, Fp)  f32
    w = w_ref[...]                                            # (Fp, Fp) f32
    b = b_ref[...]                                            # (1, Fp)  f32

    # support = x @ W   (lane-dense 128-wide contraction / output)
    support = jnp.dot(x, w, preferred_element_type=jnp.float32)          # (N, Fp)

    # Degree row-sum on the MXU, broadcast across lanes in the same op:
    # (adj @ ones)[i, c] == sum_j adj[i, j]  for every lane c.
    ones = jnp.ones_like(support)                                        # (N, Fp)
    deg = jnp.dot(adj, ones, preferred_element_type=jnp.float32)         # (N, Fp)
    d_inv_sqrt = jax.lax.rsqrt(deg + 1e-5)                               # (N, Fp)

    # (D^{-1/2} A D^{-1/2}) @ support  ==  d^{-1/2} * (A @ (d^{-1/2} * support))
    scaled = d_inv_sqrt * support                                        # (N, Fp)
    out = jnp.dot(adj, scaled, preferred_element_type=jnp.float32)       # (N, Fp)
    out = d_inv_sqrt * out + b

    # ReLU; dropout is identity in eval mode.
    # TODO(synk): training-mode dropout would need pltpu.prng_seed/prng_random_bits masking.
    o_ref[...] = jnp.maximum(out, 0.0).astype(o_ref.dtype)


def gcn_forward(x, adj, weight, bias):
    """x: (B, N, F) or (N, F); adj: (B, N, N) or (N, N); weight: (F, F); bias: (F,)."""
    squeeze = x.ndim == 2
    if squeeze:
        x = x[None]
        adj = adj[None]
    bsz, n, f = x.shape

    # Zero-pad the feature dim to a multiple of 128 for lane-dense stores/MXU.
    f_pad = ((f + 127) // 128) * 128
    pad_f = f_pad - f
    x_p = jnp.pad(x.astype(jnp.float32), ((0, 0), (0, 0), (0, pad_f)))
    w_p = jnp.pad(weight.astype(jnp.float32), ((0, pad_f), (0, pad_f)))
    b_p = jnp.pad(bias.astype(jnp.float32).reshape(1, f), ((0, 0), (0, pad_f)))
    adj = adj.astype(jnp.float32)

    out = pl.pallas_call(
        gcn_kernel,
        out_shape=jax.ShapeDtypeStruct((bsz, n, f_pad), jnp.float32),
        grid=(bsz,),
        in_specs=[
            pl.BlockSpec((None, n, f_pad), lambda i: (i, 0, 0)),   # x   (per graph)
            pl.BlockSpec((None, n, n), lambda i: (i, 0, 0)),       # adj (per graph)
            pl.BlockSpec((f_pad, f_pad), lambda i: (0, 0)),        # W   (resident)
            pl.BlockSpec((1, f_pad), lambda i: (0, 0)),            # bias (resident)
        ],
        out_specs=pl.BlockSpec((None, n, f_pad), lambda i: (i, 0, 0)),
        compiler_params=pltpu.CompilerParams(
            dimension_semantics=("parallel",),   # batch axis -> both TCs on v7x
        ),
    )(x_p, adj, w_p, b_p)

    out = out[..., :f]
    if squeeze:
        out = out[0]
    return out


def gcn_reference(x, adj, weight, bias):
    rowsum = jnp.sum(adj, axis=-1)
    d_inv_sqrt = 1.0 / jnp.sqrt(rowsum + 1e-5)
    norm_adj = d_inv_sqrt[..., :, None] * adj * d_inv_sqrt[..., None, :]
    support = x @ weight
    out = norm_adj @ support + bias
    return jnp.maximum(out, 0.0)


if __name__ == "__main__":
    # Small shapes consistent with the module: B graphs, N nodes, in_features F.
    B = 4          # batch of graphs processed in one pallas_call
    N = 8          # number of graph nodes
    F_IN = 32      # in_features (padded to 128 lanes inside the wrapper)
    # nhid / dropout exist in __init__ but do not affect eval forward math.

    key = jax.random.PRNGKey(0)
    k_x, k_adj, k_w, k_b = jax.random.split(key, 4)

    image_features = jax.random.normal(k_x, (B, N, F_IN), dtype=jnp.float32)
    # Non-negative adjacency with self-loops so degrees are well conditioned.
    adj_matrix = jax.random.uniform(k_adj, (B, N, N), dtype=jnp.float32)
    adj_matrix = adj_matrix + jnp.eye(N, dtype=jnp.float32)[None]

    # Deterministic parameter init mimicking reset_parameters():
    # uniform(-stdv, stdv), stdv = 1/sqrt(in_features)
    stdv = 1.0 / math.sqrt(F_IN)
    weight = jax.random.uniform(
        k_w, (F_IN, F_IN), dtype=jnp.float32, minval=-stdv, maxval=stdv
    )
    bias = jax.random.uniform(
        k_b, (F_IN,), dtype=jnp.float32, minval=-stdv, maxval=stdv
    )

    out = gcn_forward(image_features, adj_matrix, weight, bias)
    out = jax.block_until_ready(out)

    ref = gcn_reference(image_features, adj_matrix, weight, bias)
    assert out.shape == (B, N, F_IN)
    assert jnp.allclose(out, ref, atol=1e-4, rtol=1e-4), "mismatch vs JAX reference"

    # Also exercise the single-graph (2-D) path once.
    out1 = jax.block_until_ready(
        gcn_forward(image_features[0], adj_matrix[0], weight, bias)
    )
    assert out1.shape == (N, F_IN)
    assert jnp.allclose(out1, ref[0], atol=1e-4, rtol=1e-4), "single-graph mismatch"

    print("KERNEL_OK")
</pallas_src>

<mosaic_0001>
module attributes {stable_mosaic.version = 11 : i64} {
  func.func @gcn_kernel(%arg0: i32, %arg1: memref<1x8x128xf32, #tpu.memory_space<vmem>>, %arg2: memref<1x8x8xf32, #tpu.memory_space<vmem>>, %arg3: memref<128x128xf32, #tpu.memory_space<vmem>>, %arg4: memref<1x128xf32, #tpu.memory_space<vmem>>, %arg5: memref<1x8x128xf32, #tpu.memory_space<vmem>>) attributes {dimension_semantics = [#tpu.dimension_semantics<parallel>], iteration_bounds = array<i64: 4>, scalar_prefetch = 0 : i64, scratch_operands = 0 : i64, tpu.core_type = #tpu.core_type<tc>, window_params = [{transform_indices = @transform_0, window_bounds = array<i64: 1, 8, 128>}, {transform_indices = @transform_1, window_bounds = array<i64: 1, 8, 8>}, {pipeline_mode = #tpu.pipeline_mode<synchronous>, transform_indices = @transform_2, window_bounds = array<i64: 128, 128>}, {pipeline_mode = #tpu.pipeline_mode<synchronous>, transform_indices = @transform_3, window_bounds = array<i64: 1, 128>}, {transform_indices = @transform_4, window_bounds = array<i64: 1, 8, 128>}]} {
    %c0 = arith.constant 0 : index
    %c0_0 = arith.constant 0 : index
    %c0_1 = arith.constant 0 : index
    %0 = vector.load %arg2[%c0, %c0_0, %c0_1] : memref<1x8x8xf32, #tpu.memory_space<vmem>>, vector<1x8x8xf32>
    %1 = vector.shape_cast %0 : vector<1x8x8xf32> to vector<8x8xf32>
    %c0_2 = arith.constant 0 : index
    %c0_3 = arith.constant 0 : index
    %c0_4 = arith.constant 0 : index
    %2 = vector.load %arg1[%c0_2, %c0_3, %c0_4] : memref<1x8x128xf32, #tpu.memory_space<vmem>>, vector<1x8x128xf32>
    %3 = vector.shape_cast %2 : vector<1x8x128xf32> to vector<8x128xf32>
    %c0_5 = arith.constant 0 : index
    %c0_6 = arith.constant 0 : index
    %4 = vector.load %arg3[%c0_5, %c0_6] : memref<128x128xf32, #tpu.memory_space<vmem>>, vector<128x128xf32>
    %c0_7 = arith.constant 0 : index
    %c0_8 = arith.constant 0 : index
    %5 = vector.load %arg4[%c0_7, %c0_8] : memref<1x128xf32, #tpu.memory_space<vmem>>, vector<1x128xf32>
    %cst = arith.constant dense<0.000000e+00> : vector<8x128xf32>
    %6 = tpu.matmul %3, %4, %cst {dimension_numbers = #tpu.dot_dimension_numbers<[1], [0], [0], [1], [0, 0, 1, 1], [], []>} : vector<8x128xf32>, vector<128x128xf32>, vector<8x128xf32> -> vector<8x128xf32>
    %cst_9 = arith.constant 1.000000e+00 : f32
    %7 = vector.broadcast %cst_9 : f32 to vector<8x128xf32>
    %cst_10 = arith.constant dense<0.000000e+00> : vector<8x128xf32>
    %8 = tpu.matmul %1, %7, %cst_10 {dimension_numbers = #tpu.dot_dimension_numbers<[1], [0], [0], [1], [0, 0, 1, 1], [], []>} : vector<8x8xf32>, vector<8x128xf32>, vector<8x128xf32> -> vector<8x128xf32>
    %cst_11 = arith.constant 9.99999974E-6 : f32
    %9 = vector.broadcast %cst_11 : f32 to vector<8x128xf32>
    %10 = arith.addf %8, %9 : vector<8x128xf32>
    %11 = math.rsqrt %10 : vector<8x128xf32>
    %12 = arith.mulf %11, %6 : vector<8x128xf32>
    %cst_12 = arith.constant dense<0.000000e+00> : vector<8x128xf32>
    %13 = tpu.matmul %1, %12, %cst_12 {dimension_numbers = #tpu.dot_dimension_numbers<[1], [0], [0], [1], [0, 0, 1, 1], [], []>} : vector<8x8xf32>, vector<8x128xf32>, vector<8x128xf32> -> vector<8x128xf32>
    %14 = arith.mulf %11, %13 : vector<8x128xf32>
    %15 = vector.broadcast %5 : vector<1x128xf32> to vector<8x128xf32>
    %16 = arith.addf %14, %15 : vector<8x128xf32>
    %cst_13 = arith.constant 0.000000e+00 : f32
    %17 = vector.broadcast %cst_13 : f32 to vector<8x128xf32>
    %18 = arith.maximumf %16, %17 : vector<8x128xf32>
    %c0_14 = arith.constant 0 : index
    %c0_15 = arith.constant 0 : index
    %c0_16 = arith.constant 0 : index
    %19 = vector.load %arg5[%c0_14, %c0_15, %c0_16] : memref<1x8x128xf32, #tpu.memory_space<vmem>>, vector<1x8x128xf32>
    %20 = vector.shape_cast %19 : vector<1x8x128xf32> to vector<8x128xf32>
    %21 = vector.shape_cast %18 : vector<8x128xf32> to vector<1x8x128xf32>
    tpu.vector_store %arg5[%c0_14, %c0_15, %c0_16], %21 {strides = array<i32>} : memref<1x8x128xf32, #tpu.memory_space<vmem>>, vector<1x8x128xf32>,
    return
  }
  func.func @transform_0(%arg0: i32) -> (i32, i32, i32) {
    %c0_i32 = arith.constant 0 : i32
    %c0_i32_0 = arith.constant 0 : i32
    %c0_i32_1 = arith.constant 0 : i32
    return %arg0, %c0_i32, %c0_i32_0 : i32, i32, i32
  }
  func.func @transform_1(%arg0: i32) -> (i32, i32, i32) {
    %c0_i32 = arith.constant 0 : i32
    %c0_i32_0 = arith.constant 0 : i32
    %c0_i32_1 = arith.constant 0 : i32
    return %arg0, %c0_i32, %c0_i32_0 : i32, i32, i32
  }
  func.func @transform_2(%arg0: i32) -> (i32, i32) {
    %c0_i32 = arith.constant 0 : i32
    %c0_i32_0 = arith.constant 0 : i32
    %c0_i32_1 = arith.constant 0 : i32
    return %c0_i32, %c0_i32_0 : i32, i32
  }
  func.func @transform_3(%arg0: i32) -> (i32, i32) {
    %c0_i32 = arith.constant 0 : i32
    %c0_i32_0 = arith.constant 0 : i32
    %c0_i32_1 = arith.constant 0 : i32
    return %c0_i32, %c0_i32_0 : i32, i32
  }
  func.func @transform_4(%arg0: i32) -> (i32, i32, i32) {
    %c0_i32 = arith.constant 0 : i32
    %c0_i32_0 = arith.constant 0 : i32
    %c0_i32_1 = arith.constant 0 : i32
    return %arg0, %c0_i32, %c0_i32_0 : i32, i32, i32
  }
}

</mosaic_0001>

<llo_original>
// kernel: tpu_custom_call.1
$region0: #{tpu_custom_call.1}
  #allocation0 [shape = 'u32[]', space=smem, size = 0x4, offset = 0x4, fixed_abs, tag = 'smem constant byte address 0x4 - core index']
  #allocation1 [shape = 'u32[144,128]{1,0:T(1,128)}', space=vmem, size = 0x12000, scoped, tag = 'internal scratch']
  %s0 = inlined_call_operand.hbm [shape: f32[4,8,128], index: 0, kind: input, shape index: {}]
  %s1 = inlined_call_operand.hbm [shape: f32[4,8,8], index: 1, kind: input, shape index: {}]
  %s2 = inlined_call_operand.hbm [shape: f32[128,128], index: 2, kind: input, shape index: {}]
  %s3 = inlined_call_operand.vmem [shape: f32[1,128], index: 3, kind: input, shape index: {}]
  %s4 = inlined_call_operand.hbm [shape: f32[4,8,128], index: 4, kind: output, shape index: {}]
  %s5 = sld [smem:[#allocation0]]
  $region61: #{tpu_custom_call.1} parent=0
    _
  %s7 = ssub.s32 1, %s5
  %s8 = scalar_select 0, %s7, %s5
  $region1: #{tpu_custom_call.1} parent=0
    #allocation2 [shape = 'u8[8192]{0}', space=vmem, size = 0x2000, scoped, tag = 'input window, operand 0']
    #allocation3 [shape = 's32[2]{0}', space=sflag, size = 0x8, scoped, tag = 'scoped memory for tpu_custom_call.1']
    #allocation4 [shape = 's32[2]{0}', space=sflag, size = 0x8, scoped, tag = 'scoped memory for tpu_custom_call.1']
    #allocation5 [shape = 'u8[8192]{0}', space=vmem, size = 0x2000, scoped, tag = 'input window, operand 1']
    #allocation6 [shape = 's32[2]{0}', space=sflag, size = 0x8, scoped, tag = 'scoped memory for tpu_custom_call.1']
    #allocation7 [shape = 'u8[65536]{0}', space=vmem, size = 0x10000, scoped, tag = 'input window, operand 2, single buffered']
    #allocation8 [shape = 'u8[8192]{0}', space=vmem, size = 0x2000, scoped, tag = 'output window, operand 0']
    %9 = vsyncpa [#allocation3], 0
    %s10 = scalar_lea.sflag [#allocation3], 1
    %11 = vsyncpa %s10, 0
    %12 = vsyncpa [#allocation6], 0
    %s13 = scalar_lea.sflag [#allocation6], 1
    %14 = vsyncpa %s13, 0
    %15 = vsyncpa [#allocation4], 0
    %s16 = scalar_lea.sflag [#allocation4], 1
    %17 = vsyncpa %s16, 0
    loop: start=0, step=1, limit=6
    $region2: #{tpu_custom_call.1} parent=1 // loop_pre_header
      _
    $region3: #{tpu_custom_call.1} parent=1 // loop_header
      %s19 = sphi 0, %s23
      %p20 = scmp.ge.s32.totalorder %s19, 6
      %s29 = sphi 0, %s31
      %s32 = sphi 0, %s29
      %s33 = sphi 0, %s32
      %s49 = sphi 0, %s33
      %s55 = sphi 0, %s57
      %s58 = sphi 0, %s55
      %s59 = sphi 0, %s58
      %s75 = sphi 0, %s59
      %s79 = sphi 0, %s79
      %s81 = sphi 0, %s79
      %s82 = sphi 0, %s81
      %s96 = sphi 0, %s82
      %s100 = sphi 0, %s100
      %s102 = sphi 0, %s100
      %s103 = sphi 0, %s102
      %s117 = sphi 0, %s103
      %s123 = sphi 0, %s125
      %s126 = sphi 0, %s123
      %s127 = sphi 0, %s126
      %s143 = sphi 0, %s127
    $region4: #{tpu_custom_call.1} parent=1 // loop_header_branch
      %22 = sbr.rel (%p20) target = $region8
    $region5: #{tpu_custom_call.1} parent=1 // loop_body
      %s24 = ssub.s32 %s19, 1
      %s25 = ssub.s32 %s19, 2
      %s26 = sadd.s32 %s19, 1
      %s27 = ssub.s32 %s19, %s26
      %p28 = scmp.eq.s32.totalorder %s27, 0
      %s30 = sadd.s32 %s29, 1
      %s31 = scalar_select %p28, %s29, %s30
      %p34 = pneg %p28
      %p35 = scmp.eq.s32.totalorder %s19, 3
      %p36 = por %p34, %p35
      %p37 = scmp.ne.s32.totalorder %s29, %s32
      %p38 = scmp.eq.s32.totalorder %s19, 0
      %p39 = por %p37, %p38
      %p40 = scmp.ne.s32.totalorder %s29, %s32
      %p41 = scmp.eq.s32.totalorder %s24, 3
      %p42 = por %p40, %p41
      %p43 = scmp.ne.s32.totalorder %s32, %s33
      %p44 = scmp.eq.s32.totalorder %s24, 0
      %p45 = por %p43, %p44
      %p46 = scmp.ne.s32.totalorder %s32, %s33
      %p47 = scmp.eq.s32.totalorder %s25, 3
      %p48 = por %p46, %p47
      %p50 = scmp.ne.s32.totalorder %s33, %s49
      %p51 = scmp.eq.s32.totalorder %s25, 0
      %p52 = por %p50, %p51
      %s53 = ssub.s32 %s19, %s26
      %p54 = scmp.eq.s32.totalorder %s53, 0
      %s56 = sadd.s32 %s55, 1
      %s57 = scalar_select %p54, %s55, %s56
      %p60 = pneg %p54
      %p61 = scmp.eq.s32.totalorder %s19, 3
      %p62 = por %p60, %p61
      %p63 = scmp.ne.s32.totalorder %s55, %s58
      %p64 = scmp.eq.s32.totalorder %s19, 0
      %p65 = por %p63, %p64
      %p66 = scmp.ne.s32.totalorder %s55, %s58
      %p67 = scmp.eq.s32.totalorder %s24, 3
      %p68 = por %p66, %p67
      %p69 = scmp.ne.s32.totalorder %s58, %s59
      %p70 = scmp.eq.s32.totalorder %s24, 0
      %p71 = por %p69, %p70
      %p72 = scmp.ne.s32.totalorder %s58, %s59
      %p73 = scmp.eq.s32.totalorder %s25, 3
      %p74 = por %p72, %p73
      %p76 = scmp.ne.s32.totalorder %s59, %s75
      %p77 = scmp.eq.s32.totalorder %s25, 0
      %p78 = por %p76, %p77
      %s80 = sadd.s32 %s79, 1
      %p83 = scmp.eq.s32.totalorder %s19, 3
      %p84 = scmp.ne.s32.totalorder %s79, %s81
      %p85 = scmp.eq.s32.totalorder %s19, 0
      %p86 = por %p84, %p85
      %p87 = scmp.ne.s32.totalorder %s79, %s81
      %p88 = scmp.eq.s32.totalorder %s24, 3
      %p89 = por %p87, %p88
      %p90 = scmp.ne.s32.totalorder %s81, %s82
      %p91 = scmp.eq.s32.totalorder %s24, 0
      %p92 = por %p90, %p91
      %p93 = scmp.ne.s32.totalorder %s81, %s82
      %p94 = scmp.eq.s32.totalorder %s25, 3
      %p95 = por %p93, %p94
      %p97 = scmp.ne.s32.totalorder %s82, %s96
      %p98 = scmp.eq.s32.totalorder %s25, 0
      %p99 = por %p97, %p98
      %s101 = sadd.s32 %s100, 1
      %p104 = scmp.eq.s32.totalorder %s19, 3
      %p105 = scmp.ne.s32.totalorder %s100, %s102
      %p106 = scmp.eq.s32.totalorder %s19, 0
      %p107 = por %p105, %p106
      %p108 = scmp.ne.s32.totalorder %s100, %s102
      %p109 = scmp.eq.s32.totalorder %s24, 3
      %p110 = por %p108, %p109
      %p111 = scmp.ne.s32.totalorder %s102, %s103
      %p112 = scmp.eq.s32.totalorder %s24, 0
      %p113 = por %p111, %p112
      %p114 = scmp.ne.s32.totalorder %s102, %s103
      %p115 = scmp.eq.s32.totalorder %s25, 3
      %p116 = por %p114, %p115
      %p118 = scmp.ne.s32.totalorder %s103, %s117
      %p119 = scmp.eq.s32.totalorder %s25, 0
      %p120 = por %p118, %p119
      %s121 = ssub.s32 %s19, %s26
      %p122 = scmp.eq.s32.totalorder %s121, 0
      %s124 = sadd.s32 %s123, 1
      %s125 = scalar_select %p122, %s123, %s124
      %p128 = pneg %p122
      %p129 = scmp.eq.s32.totalorder %s19, 3
      %p130 = por %p128, %p129
      %p131 = scmp.ne.s32.totalorder %s123, %s126
      %p132 = scmp.eq.s32.totalorder %s19, 0
      %p133 = por %p131, %p132
      %p134 = scmp.ne.s32.totalorder %s123, %s126
      %p135 = scmp.eq.s32.totalorder %s24, 3
      %p136 = por %p134, %p135
      %p137 = scmp.ne.s32.totalorder %s126, %s127
      %p138 = scmp.eq.s32.totalorder %s24, 0
      %p139 = por %p137, %p138
      %p140 = scmp.ne.s32.totalorder %s126, %s127
      %p141 = scmp.eq.s32.totalorder %s25, 3
      %p142 = por %p140, %p141
      %p144 = scmp.ne.s32.totalorder %s127, %s143
      %p145 = scmp.eq.s32.totalorder %s25, 0
      %p146 = por %p144, %p145
      %p147 = scmp.le.s32.totalorder 1, %s19
      %p148 = scmp.lt.s32.totalorder %s19, 5
      %p149 = pnand %p147, %p148
      %p150 = pneg %p149
      // Predicated region
      $region9: #{tpu_custom_call.1} parent=5 // pred_check
        _
      $region10: #{tpu_custom_call.1} parent=5 // pred_check_branch
        %152 = sbr.rel (%p149) target = $region12
      $region11: #{tpu_custom_call.1} parent=5 // pred_region
        %s153 = ssub.s32 %s19, 1
        // Predicated region
        $region13: #{tpu_custom_call.1} parent=11 // pred_check
          %p154 = pneg %p92
        $region14: #{tpu_custom_call.1} parent=11 // pred_check_branch
          %156 = sbr.rel (%p154) target = $region16
        $region15: #{tpu_custom_call.1} parent=11 // pred_region
          %s158 = ssub.s32 2048, 2048
          %159 = vsyncadd [#allocation6], %s158
          %s160 = sshll.u32 [#allocation7], 4
          %s161 = int_to_ptr.vmem [resolvable:$true] %s160
          %166 = dma.hbm_to_vmem [thread:$0]  %s2, 2048, %s161, [#allocation6], 128, 128, 8
        $region16: #{tpu_custom_call.1} parent=11 // pred_fallthru
          _
        // Predicated region
        $region17: #{tpu_custom_call.1} parent=11 // pred_check
          %p167 = pneg %p113
        $region18: #{tpu_custom_call.1} parent=11 // pred_check_branch
          %169 = sbr.rel (%p167) target = $region20
        $region19: #{tpu_custom_call.1} parent=11 // pred_region
          _
        $region20: #{tpu_custom_call.1} parent=11 // pred_fallthru
          _
      $region12: #{tpu_custom_call.1} parent=5 // pred_fallthru
        _
      %p170 = scmp.lt.s32.totalorder %s19, 4
      // Predicated region
      $region21: #{tpu_custom_call.1} parent=5 // pred_check
        %p171 = pneg %p170
      $region22: #{tpu_custom_call.1} parent=5 // pred_check_branch
        %173 = sbr.rel (%p171) target = $region24
      $region23: #{tpu_custom_call.1} parent=5 // pred_region
        // Predicated region
        $region25: #{tpu_custom_call.1} parent=23 // pred_check
          %p174 = pneg %p39
        $region26: #{tpu_custom_call.1} parent=23 // pred_check_branch
          %176 = sbr.rel (%p174) target = $region28
        $region27: #{tpu_custom_call.1} parent=23 // pred_region
          %s177 = sand.u32 %s29, 1
          %s178 = scalar_lea.sflag [#allocation3], %s177
          %s179 = sand.u32 %s29, 1
          %s180 = smul.addr %s179, 8
          %s181 = scalar_lea.vmem [#allocation2], %s180
          %s183 = ssub.s32 128, 128
          %184 = vsyncadd %s178, %s183
          %s185 = smul.addr %s19, 128
          %s186 = scalar_lea.hbm %s0, %s185
          %s188 = sshll.u32 %s181, 4
          %s189 = int_to_ptr.vmem [resolvable:$true] %s188
          %191 = dma.hbm_to_vmem [thread:$0]  %s186, 128, %s189, %s178
        $region28: #{tpu_custom_call.1} parent=23 // pred_fallthru
          _
        // Predicated region
        $region29: #{tpu_custom_call.1} parent=23 // pred_check
          %p192 = pneg %p65
        $region30: #{tpu_custom_call.1} parent=23 // pred_check_branch
          %194 = sbr.rel (%p192) target = $region32
        $region31: #{tpu_custom_call.1} parent=23 // pred_region
          %s195 = sand.u32 %s19, 1
          %s196 = scalar_lea.sflag [#allocation6], %s195
          %s197 = sand.u32 %s55, 1
          %s198 = smul.addr %s197, 8
          %s199 = scalar_lea.vmem [#allocation5], %s198
          %s201 = ssub.s32 128, 128
          %202 = vsyncadd %s196, %s201
          %s203 = smul.addr %s19, 128
          %s204 = scalar_lea.hbm %s1, %s203
          %s206 = sshll.u32 %s199, 4
          %s207 = int_to_ptr.vmem [resolvable:$true] %s206
          %209 = dma.hbm_to_vmem [thread:$0]  %s204, 128, %s207, %s196
        $region32: #{tpu_custom_call.1} parent=23 // pred_fallthru
          _
      $region24: #{tpu_custom_call.1} parent=5 // pred_fallthru
        _
      %p210 = scmp.le.s32.totalorder 1, %s19
      %p211 = scmp.lt.s32.totalorder %s19, 5
      %p212 = pnand %p210, %p211
      %p213 = pneg %p212
      // Predicated region
      $region33: #{tpu_custom_call.1} parent=5 // pred_check
        _
      $region34: #{tpu_custom_call.1} parent=5 // pred_check_branch
        %215 = sbr.rel (%p212) target = $region36
      $region35: #{tpu_custom_call.1} parent=5 // pred_region
        %s216 = ssub.s32 %s19, 1
        %s217 = sand.u32 %s32, 1
        %s218 = scalar_lea.sflag [#allocation3], %s217
        %s219 = sand.u32 %s32, 1
        %s220 = smul.addr %s219, 8
        %s221 = scalar_lea.vmem [#allocation2], %s220
        // Predicated region
        $region37: #{tpu_custom_call.1} parent=35 // pred_check
          %p222 = pneg %p45
        $region38: #{tpu_custom_call.1} parent=35 // pred_check_branch
          %224 = sbr.rel (%p222) target = $region40
        $region39: #{tpu_custom_call.1} parent=35 // pred_region
          %225 = dma.done %s218, 128
        $region40: #{tpu_custom_call.1} parent=35 // pred_fallthru
          _
        %s226 = sand.u32 %s24, 1
        %s227 = scalar_lea.sflag [#allocation6], %s226
        %s228 = sand.u32 %s58, 1
        %s229 = smul.addr %s228, 8
        %s230 = scalar_lea.vmem [#allocation5], %s229
        // Predicated region
        $region41: #{tpu_custom_call.1} parent=35 // pred_check
          %p231 = pneg %p71
        $region42: #{tpu_custom_call.1} parent=35 // pred_check_branch
          %233 = sbr.rel (%p231) target = $region44
        $region43: #{tpu_custom_call.1} parent=35 // pred_region
          %234 = dma.done %s227, 128
        $region44: #{tpu_custom_call.1} parent=35 // pred_fallthru
          _
        // Predicated region
        $region45: #{tpu_custom_call.1} parent=35 // pred_check
          %p235 = pneg %p92
        $region46: #{tpu_custom_call.1} parent=35 // pred_check_branch
          %237 = sbr.rel (%p235) target = $region48
        $region47: #{tpu_custom_call.1} parent=35 // pred_region
          %238 = dma.done [#allocation6], 2048
        $region48: #{tpu_custom_call.1} parent=35 // pred_fallthru
          _
        %s239 = sand.u32 %s32, 1
        %s240 = scalar_lea.sflag [#allocation3], %s239
        %s241 = sand.u32 %s32, 1
        %s242 = smul.addr %s241, 8
        %s243 = scalar_lea.vmem [#allocation2], %s242
        %p244 = pneg %p45
        %p245 = pneg %p42
        %s246 = sand.u32 %s24, 1
        %s247 = scalar_lea.sflag [#allocation6], %s246
        %s248 = sand.u32 %s58, 1
        %s249 = smul.addr %s248, 8
        %s250 = scalar_lea.vmem [#allocation5], %s249
        %p251 = pneg %p71
        %p252 = pneg %p68
        %p253 = pneg %p92
        %p254 = pneg %p89
        %p255 = pneg %p113
        %p256 = pneg %p110
        %p257 = pneg %p139
        %p258 = pneg %p136
        %s259 = sand.u32 %s126, 1
        %s260 = scalar_lea.sflag [#allocation4], %s259
        %s261 = sand.u32 %s126, 1
        %s262 = smul.addr %s261, 8
        %s263 = scalar_lea.vmem [#allocation8], %s262
        %v264 = vld [vmem:[%s230] sm:$0xff]
        %v265 = vld [vmem:[%s221] sm:$0xff]
        %v266 = vld [vmem:[#allocation7] sm:$0xff]
        %v267 = vld [vmem:[#allocation7 + $0x8] sm:$0xff]
        %v268 = vld [vmem:[#allocation7 + $0x10] sm:$0xff]
        %v269 = vld [vmem:[#allocation7 + $0x18] sm:$0xff]
        %v270 = vld [vmem:[#allocation7 + $0x20] sm:$0xff]
        %v271 = vld [vmem:[#allocation7 + $0x28] sm:$0xff]
        %v272 = vld [vmem:[#allocation7 + $0x30] sm:$0xff]
        %v273 = vld [vmem:[#allocation7 + $0x38] sm:$0xff]
        %v274 = vld [vmem:[#allocation7 + $0x40] sm:$0xff]
        %v275 = vld [vmem:[#allocation7 + $0x48] sm:$0xff]
        %v276 = vld [vmem:[#allocation7 + $0x50] sm:$0xff]
        %v277 = vld [vmem:[#allocation7 + $0x58] sm:$0xff]
        %v278 = vld [vmem:[#allocation7 + $0x60] sm:$0xff]
        %v279 = vld [vmem:[#allocation7 + $0x68] sm:$0xff]
        %v280 = vld [vmem:[#allocation7 + $0x70] sm:$0xff]
        %v281 = vld [vmem:[#allocation7 + $0x78] sm:$0xff]
        %v282 = vld [vmem:[%s3] sm:$0x1]
        %283 = vmatprep.subr.mxu0 0.0
        %284 = vmatpush1.msra.mxu0 %v281
        %285 = vmatprep.subr.mxu0 0.0
        %286 = vmatpush1.msra.mxu0 %v280
        %287 = vmatprep.subr.mxu0 0.0
        %288 = vmatpush1.msra.mxu0 %v279
        %289 = vmatprep.subr.mxu0 0.0
        %290 = vmatpush1.msra.mxu0 %v278
        %291 = vmatprep.subr.mxu0 0.0
        %292 = vmatpush1.msra.mxu0 %v277
        %293 = vmatprep.subr.mxu0 0.0
        %294 = vmatpush1.msra.mxu0 %v276
        %295 = vmatprep.subr.mxu0 0.0
        %296 = vmatpush1.msra.mxu0 %v275
        %297 = vmatprep.subr.mxu0 0.0
        %298 = vmatpush1.msra.mxu0 %v274
        %299 = vmatprep.subr.mxu0 0.0
        %300 = vmatpush1.msra.mxu0 %v273
        %301 = vmatprep.subr.mxu0 0.0
        %302 = vmatpush1.msra.mxu0 %v272
        %303 = vmatprep.subr.mxu0 0.0
        %304 = vmatpush1.msra.mxu0 %v271
        %305 = vmatprep.subr.mxu0 0.0
        %306 = vmatpush1.msra.mxu0 %v270
        %307 = vmatprep.subr.mxu0 0.0
        %308 = vmatpush1.msra.mxu0 %v269
        %309 = vmatprep.subr.mxu0 0.0
        %310 = vmatpush1.msra.mxu0 %v268
        %311 = vmatprep.subr.mxu0 0.0
        %312 = vmatpush1.msra.mxu0 %v267
        %313 = vmatprep.subr.mxu0 0.0
        %314 = vmatpush1.msra.mxu0 %v266
        %315 = vmatprep.subr.mxu0 0.0
        %316 = vmatpush2.msra.mxu0 0.0
        %317 = vmatprep.subr.mxu0 0.0
        %318 = vmatpush2.msra.mxu0 0.0
        %319 = vmatprep.subr.mxu0 0.0
        %320 = vmatpush2.msra.mxu0 0.0
        %321 = vmatprep.subr.mxu0 0.0
        %322 = vmatpush2.msra.mxu0 0.0
        %323 = vmatprep.subr.mxu0 0.0
        %324 = vmatpush2.msra.mxu0 0.0
        %325 = vmatprep.subr.mxu0 0.0
        %326 = vmatpush2.msra.mxu0 0.0
        %327 = vmatprep.subr.mxu0 0.0
        %328 = vmatpush2.msra.mxu0 0.0
        %329 = vmatprep.subr.mxu0 0.0
        %330 = vmatpush2.msra.mxu0 0.0
        %331 = vmatprep.subr.mxu0 0.0
        %332 = vmatpush2.msra.mxu0 0.0
        %333 = vmatprep.subr.mxu0 0.0
        %334 = vmatpush2.msra.mxu0 0.0
        %335 = vmatprep.subr.mxu0 0.0
        %336 = vmatpush2.msra.mxu0 0.0
        %337 = vmatprep.subr.mxu0 0.0
        %338 = vmatpush2.msra.mxu0 0.0
        %339 = vmatprep.subr.mxu0 0.0
        %340 = vmatpush2.msra.mxu0 0.0
        %341 = vmatprep.subr.mxu0 0.0
        %342 = vmatpush2.msra.mxu0 0.0
        %343 = vmatprep.subr.mxu0 0.0
        %344 = vmatpush2.msra.mxu0 0.0
        %345 = vmatprep.subr.mxu0 0.0
        %346 = vmatpush2.msra.mxu0 0.0
        %347 = vmatprep.mubr.f32.mxu0 0.0
        %348 = vmatmul.mubr.f32.gmra.mxu0 %v265
        %v349 = vpop.f32.mrf.mxu0
        %v350 = vadd.f32 0.0, %v349
        %v351 = vpop.f32.mrf.mxu0
        %352 = vdwg.mxu0
        %vm353 = vcmask 64512
        %v355 = vsel %vm353, %v264, 0
        %357 = vmatprep.subr.mxu0 0.0
        %358 = vmatpush1.msra.mxu0 0.0
        %359 = vmatprep.subr.mxu0 0.0
        %360 = vmatpush1.msra.mxu0 0.0
        %361 = vmatprep.subr.mxu0 0.0
        %362 = vmatpush1.msra.mxu0 0.0
        %363 = vmatprep.subr.mxu0 0.0
        %364 = vmatpush1.msra.mxu0 0.0
        %365 = vmatprep.subr.mxu0 0.0
        %366 = vmatpush1.msra.mxu0 0.0
        %367 = vmatprep.subr.mxu0 0.0
        %368 = vmatpush1.msra.mxu0 0.0
        %369 = vmatprep.subr.mxu0 0.0
        %370 = vmatpush1.msra.mxu0 0.0
        %371 = vmatprep.subr.mxu0 0.0
        %372 = vmatpush1.msra.mxu0 0.0
        %373 = vmatprep.subr.mxu0 0.0
        %374 = vmatpush1.msra.mxu0 0.0
        %375 = vmatprep.subr.mxu0 0.0
        %376 = vmatpush1.msra.mxu0 0.0
        %377 = vmatprep.subr.mxu0 0.0
        %378 = vmatpush1.msra.mxu0 0.0
        %379 = vmatprep.subr.mxu0 0.0
        %380 = vmatpush1.msra.mxu0 0.0
        %381 = vmatprep.subr.mxu0 0.0
        %382 = vmatpush1.msra.mxu0 0.0
        %383 = vmatprep.subr.mxu0 0.0
        %384 = vmatpush1.msra.mxu0 0.0
        %385 = vmatprep.subr.mxu0 0.0
        %386 = vmatpush1.msra.mxu0 0.0
        %387 = vmatprep.subr.mxu0 0.0
        %388 = vmatpush1.msra.mxu0 1.0
        %389 = vmatprep.subr.mxu0 0.0
        %390 = vmatpush2.msra.mxu0 0.0
        %391 = vmatprep.subr.mxu0 0.0
        %392 = vmatpush2.msra.mxu0 0.0
        %393 = vmatprep.subr.mxu0 0.0
        %394 = vmatpush2.msra.mxu0 0.0
        %395 = vmatprep.subr.mxu0 0.0
        %396 = vmatpush2.msra.mxu0 0.0
        %397 = vmatprep.subr.mxu0 0.0
        %398 = vmatpush2.msra.mxu0 0.0
        %399 = vmatprep.subr.mxu0 0.0
        %400 = vmatpush2.msra.mxu0 0.0
        %401 = vmatprep.subr.mxu0 0.0
        %402 = vmatpush2.msra.mxu0 0.0
        %403 = vmatprep.subr.mxu0 0.0
        %404 = vmatpush2.msra.mxu0 0.0
        %405 = vmatprep.subr.mxu0 0.0
        %406 = vmatpush2.msra.mxu0 0.0
        %407 = vmatprep.subr.mxu0 0.0
        %408 = vmatpush2.msra.mxu0 0.0
        %409 = vmatprep.subr.mxu0 0.0
        %410 = vmatpush2.msra.mxu0 0.0
        %411 = vmatprep.subr.mxu0 0.0
        %412 = vmatpush2.msra.mxu0 0.0
        %413 = vmatprep.subr.mxu0 0.0
        %414 = vmatpush2.msra.mxu0 0.0
        %415 = vmatprep.subr.mxu0 0.0
        %416 = vmatpush2.msra.mxu0 0.0
        %417 = vmatprep.subr.mxu0 0.0
        %418 = vmatpush2.msra.mxu0 0.0
        %419 = vmatprep.subr.mxu0 0.0
        %420 = vmatpush2.msra.mxu0 0.0
        %421 = vmatprep.mubr.f32.mxu0 0.0
        %422 = vmatmul.mubr.f32.gmra.mxu0 %v355
        %v423 = vpop.f32.mrf.mxu0
        %v424 = vadd.f32 1e-05, %v423
        %v425 = vpop.f32.mrf.mxu0
        %426 = vdwg.mxu0
        %v427 = vrsqrt.pop %v424
        %v428 = vmul.f32 %v427, %v350
        %429 = vmatprep.subr.mxu0 0.0
        %430 = vmatpush1.msra.mxu0 0.0
        %431 = vmatprep.subr.mxu0 0.0
        %432 = vmatpush1.msra.mxu0 0.0
        %433 = vmatprep.subr.mxu0 0.0
        %434 = vmatpush1.msra.mxu0 0.0
        %435 = vmatprep.subr.mxu0 0.0
        %436 = vmatpush1.msra.mxu0 0.0
        %437 = vmatprep.subr.mxu0 0.0
        %438 = vmatpush1.msra.mxu0 0.0
        %439 = vmatprep.subr.mxu0 0.0
        %440 = vmatpush1.msra.mxu0 0.0
        %441 = vmatprep.subr.mxu0 0.0
        %442 = vmatpush1.msra.mxu0 0.0
        %443 = vmatprep.subr.mxu0 0.0
        %444 = vmatpush1.msra.mxu0 0.0
        %445 = vmatprep.subr.mxu0 0.0
        %446 = vmatpush1.msra.mxu0 0.0
        %447 = vmatprep.subr.mxu0 0.0
        %448 = vmatpush1.msra.mxu0 0.0
        %449 = vmatprep.subr.mxu0 0.0
        %450 = vmatpush1.msra.mxu0 0.0
        %451 = vmatprep.subr.mxu0 0.0
        %452 = vmatpush1.msra.mxu0 0.0
        %453 = vmatprep.subr.mxu0 0.0
        %454 = vmatpush1.msra.mxu0 0.0
        %455 = vmatprep.subr.mxu0 0.0
        %456 = vmatpush1.msra.mxu0 0.0
        %457 = vmatprep.subr.mxu0 0.0
        %458 = vmatpush1.msra.mxu0 0.0
        %459 = vmatprep.subr.mxu0 0.0
        %460 = vmatpush1.msra.mxu0 %v428
        %461 = vmatprep.subr.mxu0 0.0
        %462 = vmatpush2.msra.mxu0 0.0
        %463 = vmatprep.subr.mxu0 0.0
        %464 = vmatpush2.msra.mxu0 0.0
        %465 = vmatprep.subr.mxu0 0.0
        %466 = vmatpush2.msra.mxu0 0.0
        %467 = vmatprep.subr.mxu0 0.0
        %468 = vmatpush2.msra.mxu0 0.0
        %469 = vmatprep.subr.mxu0 0.0
        %470 = vmatpush2.msra.mxu0 0.0
        %471 = vmatprep.subr.mxu0 0.0
        %472 = vmatpush2.msra.mxu0 0.0
        %473 = vmatprep.subr.mxu0 0.0
        %474 = vmatpush2.msra.mxu0 0.0
        %475 = vmatprep.subr.mxu0 0.0
        %476 = vmatpush2.msra.mxu0 0.0
        %477 = vmatprep.subr.mxu0 0.0
        %478 = vmatpush2.msra.mxu0 0.0
        %479 = vmatprep.subr.mxu0 0.0
        %480 = vmatpush2.msra.mxu0 0.0
        %481 = vmatprep.subr.mxu0 0.0
        %482 = vmatpush2.msra.mxu0 0.0
        %483 = vmatprep.subr.mxu0 0.0
        %484 = vmatpush2.msra.mxu0 0.0
        %485 = vmatprep.subr.mxu0 0.0
        %486 = vmatpush2.msra.mxu0 0.0
        %487 = vmatprep.subr.mxu0 0.0
        %488 = vmatpush2.msra.mxu0 0.0
        %489 = vmatprep.subr.mxu0 0.0
        %490 = vmatpush2.msra.mxu0 0.0
        %491 = vmatprep.subr.mxu0 0.0
        %492 = vmatpush2.msra.mxu0 0.0
        %493 = vmatprep.mubr.f32.mxu0 0.0
        %494 = vmatmul.mubr.f32.gmra.mxu0 %v355
        %v495 = vpop.f32.mrf.mxu0
        %v496 = vadd.f32 0.0, %v495
        %v497 = vpop.f32.mrf.mxu0
        %498 = vdwg.mxu0
        %v499 = vmul.f32 %v427, %v496
        %v501 = vlaneseq
        %v502 = vshrl.u32 %v501, 7
        %v503 = vsub.s32 0, %v502
        %v504 = vrot.slane %v282, %v503
        %v506 = vadd.f32 %v499, %v504
        %v507 = vmax.f32 %v506, 0.0
        %508 = vst [vmem:[%s263] sm:$0xff] %v507
        %s509 = sand.u32 %s126, 1
        %s510 = scalar_lea.sflag [#allocation4], %s509
        %s511 = sand.u32 %s126, 1
        %s512 = smul.addr %s511, 8
        %s513 = scalar_lea.vmem [#allocation8], %s512
        // Predicated region
        $region49: #{tpu_custom_call.1} parent=35 // pred_check
          %p514 = pneg %p136
        $region50: #{tpu_custom_call.1} parent=35 // pred_check_branch
          %516 = sbr.rel (%p514) target = $region52
        $region51: #{tpu_custom_call.1} parent=35 // pred_region
          %s518 = ssub.s32 128, 128
          %519 = vsyncadd %s510, %s518
          %s520 = smul.addr %s24, 128
          %s521 = scalar_lea.hbm %s4, %s520
          %s523 = sshll.u32 %s513, 4
          %s524 = int_to_ptr.vmem [resolvable:$true] %s523
          %526 = dma.vmem_to_hbm [thread:$0]  %s524, 128, %s521, %s510
        $region52: #{tpu_custom_call.1} parent=35 // pred_fallthru
          _
      $region36: #{tpu_custom_call.1} parent=5 // pred_fallthru
        _
      %p527 = scmp.le.s32.totalorder 2, %s19
      // Predicated region
      $region53: #{tpu_custom_call.1} parent=5 // pred_check
        %p528 = pneg %p527
      $region54: #{tpu_custom_call.1} parent=5 // pred_check_branch
        %530 = sbr.rel (%p528) target = $region56
      $region55: #{tpu_custom_call.1} parent=5 // pred_region
        %s531 = ssub.s32 %s19, 2
        // Predicated region
        $region57: #{tpu_custom_call.1} parent=55 // pred_check
          %p532 = pneg %p142
        $region58: #{tpu_custom_call.1} parent=55 // pred_check_branch
          %534 = sbr.rel (%p532) target = $region60
        $region59: #{tpu_custom_call.1} parent=55 // pred_region
          %s535 = sand.u32 %s127, 1
          %s536 = scalar_lea.sflag [#allocation4], %s535
          %s537 = sand.u32 %s127, 1
          %s538 = smul.addr %s537, 8
          %s539 = scalar_lea.vmem [#allocation8], %s538
          %540 = dma.done %s536, 128
        $region60: #{tpu_custom_call.1} parent=55 // pred_fallthru
          _
      $region56: #{tpu_custom_call.1} parent=5 // pred_fallthru
        _
    $region6: #{tpu_custom_call.1} parent=1 // loop_footer
      %s23 = sadd.s32 1, %s19
    $region7: #{tpu_custom_call.1} parent=1 // loop_footer_branch
      %18 = sbr.rel target = $region3
    $region8: #{tpu_custom_call.1} parent=1 // loop_exit
      _
    %541 = vsyncpa [#allocation3], 1
    %s542 = scalar_lea.sflag [#allocation3], 1
    %543 = vsyncpa %s542, 1
    %544 = vsyncpa [#allocation6], 1
    %s545 = scalar_lea.sflag [#allocation6], 1
    %546 = vsyncpa %s545, 1
    %547 = vsyncpa [#allocation4], 1
    %s548 = scalar_lea.sflag [#allocation4], 1
    %549 = vsyncpa %s548, 1

</llo_original>
